<compile_context>
chip_gen: v6e
topology: v6e:2x2x1
jax: 0.10.0
libtpu: 0.0.40
codegen_flags: <defaults>
</compile_context>

<pallas_src>
import functools
import math
from typing import Dict, List, Optional, Tuple

import numpy as np
import jax
import jax.numpy as jnp
from jax.experimental import pallas as pl
from jax.experimental.pallas import tpu as pltpu


# ----------------------------------------------------------------------------
# VMEM budget (generation-aware, with a safe fallback).
# ----------------------------------------------------------------------------
def _detect_vmem_capacity() -> int:
    cap = 64 * 1024 * 1024  # conservative default (v7x per-TC VMEM)
    try:
        info = pltpu.get_tpu_info()
        cap = int(getattr(info, "vmem_capacity_bytes", cap))
    except Exception:
        pass
    return cap


_VMEM_CAP_BYTES = _detect_vmem_capacity()
_VMEM_LIMIT_BYTES = min((_VMEM_CAP_BYTES * 3) // 4, 100 * 1024 * 1024)


def _footprint_bytes(tm: int, h_in: int, w_in: int, w_pad: int) -> int:
    """Rough double-buffered VMEM footprint of one grid step."""
    img = 2 * h_in * w_in * 2          # bf16 image plane
    wwt = 2 * w_in * w_pad * 2         # bf16 Ww^T
    wh = 2 * tm * h_in * 2             # bf16 Wh row tile
    out = 2 * tm * w_pad * 4           # f32 output tile
    bias = 2 * w_pad * 4               # f32 masked bias row
    interm = tm * (w_in * 6 + w_pad * 12)  # tmp f32 + bf16 copy + res/scaled
    return img + wwt + wh + out + bias + interm


def _pick_row_tile(h_pad: int, h_in: int, w_in: int, w_pad: int) -> int:
    """Largest multiple-of-8 tile dividing h_pad that fits the VMEM budget."""
    budget = max(_VMEM_LIMIT_BYTES - 8 * 1024 * 1024, 8 * 1024 * 1024)
    cands = [d for d in range(8, h_pad + 1, 8) if h_pad % d == 0]
    if not cands:
        return h_pad  # full-extent block is always legal
    for tm in sorted(cands, reverse=True):
        if _footprint_bytes(tm, h_in, w_in, w_pad) <= budget:
            return tm
    return cands[0]


# ----------------------------------------------------------------------------
# Pallas kernel: fused resize (2 matmuls) + masked normalize + pad.
# Grid = (C, H_pad // TM); each step produces a (TM, W_pad) output row tile of
# one channel and writes it into image slot meta[0] of the batch tensor.
# meta = [img_idx, h_out] (int32 scalar-prefetch, SMEM).
# ----------------------------------------------------------------------------
def _resize_norm_body(meta_ref, scale_ref, bias_ref, x_ref, wh_ref, wwt_ref,
                      o_ref, *, tm):
    c = pl.program_id(0)
    t = pl.program_id(1)
    h_out = meta_ref[1]
    s = scale_ref[c]                      # 1/std  (per-channel scalar, SMEM)

    # rows: (TM, H_in) @ (H_in, W_in) -> (TM, W_in), f32 accumulation on MXU.
    tmp = jnp.dot(wh_ref[...], x_ref[0], preferred_element_type=jnp.float32)
    # cols: (TM, W_in) @ (W_in, W_pad) -> (TM, W_pad); Ww^T pre-transposed.
    res = jnp.dot(tmp.astype(jnp.bfloat16), wwt_ref[...],
                  preferred_element_type=jnp.float32)

    scaled = res * s
    bias_row = bias_ref[0]                # (1, W_pad) f32, column-masked host-side
    row_start = t * tm

    # Interior tiles: no iota, no select -- just add the pre-masked bias row.
    @pl.when(row_start + tm <= h_out)
    def _():
        o_ref[0, 0] = (scaled + bias_row).astype(o_ref.dtype)

    # Boundary / overflow tiles: mask bias rows >= h_out so padding stays 0
    # (the matmul result is already exactly 0 there).
    @pl.when(row_start + tm > h_out)
    def _():
        rows = jax.lax.broadcasted_iota(jnp.int32, scaled.shape, 0) + row_start
        masked = jnp.where(rows < h_out, bias_row, jnp.float32(0.0))
        o_ref[0, 0] = (scaled + masked).astype(o_ref.dtype)


def _kernel_fresh(meta_ref, scale_ref, bias_ref, x_ref, wh_ref, wwt_ref,
                  o_ref, *, tm):
    _resize_norm_body(meta_ref, scale_ref, bias_ref, x_ref, wh_ref, wwt_ref,
                      o_ref, tm=tm)


def _kernel_alias(meta_ref, scale_ref, bias_ref, x_ref, wh_ref, wwt_ref,
                  batch_ref, o_ref, *, tm):
    del batch_ref  # present only for input_output_aliases (in-place write)
    _resize_norm_body(meta_ref, scale_ref, bias_ref, x_ref, wh_ref, wwt_ref,
                      o_ref, tm=tm)


def _pallas_norm_resize_pad(meta, scale, bias_rows, image, wh, wwt,
                            batch=None, *, tm, batch_shape=None):
    """Writes normalize(resize(image)) (zero padded) into slot meta[0]."""
    C, H_in, W_in = image.shape
    if batch is not None:
        batch_shape = batch.shape
    _, _, H_pad, W_pad = batch_shape

    in_specs = [
        pl.BlockSpec(memory_space=pltpu.MemorySpace.SMEM),          # scale (C,)
        pl.BlockSpec((1, 1, W_pad), lambda c, t, m: (c, 0, 0)),     # masked bias
        pl.BlockSpec((1, H_in, W_in), lambda c, t, m: (c, 0, 0)),   # image plane
        pl.BlockSpec((tm, H_in), lambda c, t, m: (t, 0)),           # Wh row tile
        pl.BlockSpec((W_in, W_pad), lambda c, t, m: (0, 0)),        # Ww^T
    ]
    args = [meta, scale, bias_rows, image, wh, wwt]
    aliases = {}
    if batch is not None:
        in_specs.append(pl.BlockSpec(memory_space=pl.ANY))          # batch (aliased)
        args.append(batch)
        aliases = {6: 0}  # flat operand index (incl. scalar prefetch) -> output 0
        kernel = functools.partial(_kernel_alias, tm=tm)
    else:
        kernel = functools.partial(_kernel_fresh, tm=tm)

    return pl.pallas_call(
        kernel,
        out_shape=jax.ShapeDtypeStruct(batch_shape, jnp.float32),
        grid_spec=pltpu.PrefetchScalarGridSpec(
            num_scalar_prefetch=1,
            grid=(C, H_pad // tm),
            in_specs=in_specs,
            out_specs=pl.BlockSpec((1, 1, tm, W_pad),
                                   lambda c, t, m: (m[0], c, t, 0)),
        ),
        input_output_aliases=aliases,
        compiler_params=pltpu.CompilerParams(
            dimension_semantics=("parallel", "parallel"),
            vmem_limit_bytes=_VMEM_LIMIT_BYTES),
    )(*args)


# Module-level jitted wrappers: persistent compile cache keyed by shapes only
# (img_idx / h_out are runtime scalars), and real buffer donation for the
# in-place batch update (no hidden full-canvas device copies).
@functools.partial(jax.jit, static_argnames=("tm", "batch_shape"))
def _fresh_call(meta, scale, bias_rows, image, wh, wwt, *, tm, batch_shape):
    return _pallas_norm_resize_pad(meta, scale, bias_rows, image, wh, wwt,
                                   tm=tm, batch_shape=batch_shape)


@functools.partial(jax.jit, static_argnames=("tm",), donate_argnums=(0,))
def _update_call(batch, meta, scale, bias_rows, image, wh, wwt, *, tm):
    return _pallas_norm_resize_pad(meta, scale, bias_rows, image, wh, wwt,
                                   batch=batch, tm=tm)


# ----------------------------------------------------------------------------
# Host-side helpers.
# ----------------------------------------------------------------------------
def _bilinear_matrix(out_size: int, in_size: int, pad_to: int) -> np.ndarray:
    """Interpolation matrix matching torch bilinear, align_corners=False."""
    m = np.zeros((pad_to, in_size), dtype=np.float32)
    if out_size > 0:
        ratio = in_size / out_size
        d = np.arange(out_size)
        src = np.clip((d + 0.5) * ratio - 0.5, 0.0, None)
        i0 = np.minimum(np.floor(src).astype(np.int64), in_size - 1)
        i1 = np.minimum(i0 + 1, in_size - 1)
        w1 = (src - i0).astype(np.float32)
        w0 = 1.0 - w1
        m[d, i0] += w0
        m[d, i1] += w1
    return m


def _resized_hw(h: int, w: int, min_size: float, max_size: float,
                fixed_size) -> Tuple[int, int]:
    if fixed_size is not None:
        return int(fixed_size[1]), int(fixed_size[0])
    mn, mx = float(min(h, w)), float(max(h, w))
    # Mimic torch: the scale is computed in f32 inside _resize_image_and_masks.
    scale = float(np.minimum(np.float32(min_size) / np.float32(mn),
                             np.float32(max_size) / np.float32(mx)))
    return int(math.floor(h * scale)), int(math.floor(w * scale))


def _resize_boxes(boxes, original_size, new_size):
    ratio_h = float(new_size[0]) / float(original_size[0])
    ratio_w = float(new_size[1]) / float(original_size[1])
    xmin, ymin, xmax, ymax = boxes[:, 0], boxes[:, 1], boxes[:, 2], boxes[:, 3]
    return jnp.stack((xmin * ratio_w, ymin * ratio_h,
                      xmax * ratio_w, ymax * ratio_h), axis=1)


def _resize_keypoints(keypoints, original_size, new_size):
    ratio_h = float(new_size[0]) / float(original_size[0])
    ratio_w = float(new_size[1]) / float(original_size[1])
    resized = keypoints.at[..., 0].multiply(ratio_w)
    resized = resized.at[..., 1].multiply(ratio_h)
    return resized


class ImageList:
    def __init__(self, tensors, image_sizes):
        self.tensors = tensors
        self.image_sizes = image_sizes


class CustomRCNNTransformPallas:
    """Eval-mode forward of CustomRCNNTransform (normalize + resize + batch)."""

    def __init__(self, min_size, max_size, image_mean, image_std,
                 size_divisible=32, fixed_size=None):
        if not isinstance(min_size, (list, tuple)):
            min_size = (min_size,)
        self.min_size = min_size
        self.max_size = max_size
        self.image_mean = np.asarray(image_mean, dtype=np.float32)
        self.image_std = np.asarray(image_std, dtype=np.float32)
        self.size_divisible = size_divisible
        self.fixed_size = fixed_size
        # Normalization constants (device-resident once).
        self._scale = jnp.asarray(1.0 / self.image_std, dtype=jnp.float32)
        self._neg_mean_over_std = (-self.image_mean / self.image_std).astype(
            np.float32)
        # Device-array caches keyed by shape signature.
        self._wh_cache: Dict[Tuple[int, int, int], jnp.ndarray] = {}
        self._wwt_cache: Dict[Tuple[int, int, int], jnp.ndarray] = {}
        self._bias_cache: Dict[Tuple[int, int, int], jnp.ndarray] = {}
        # TODO(synk): training-mode torch_choice(min_size) (host-side RNG) not
        # implemented; eval semantics (min_size[-1]) are used.

    # -------------------- cached interpolation / bias inputs ----------------
    def _get_wh(self, out_size: int, in_size: int, pad_to: int):
        key = (out_size, in_size, pad_to)
        w = self._wh_cache.get(key)
        if w is None:
            w = jnp.asarray(_bilinear_matrix(out_size, in_size, pad_to),
                            dtype=jnp.bfloat16)
            self._wh_cache[key] = w
        return w

    def _get_wwt(self, out_size: int, in_size: int, pad_to: int):
        key = (out_size, in_size, pad_to)
        w = self._wwt_cache.get(key)
        if w is None:
            w = jnp.asarray(_bilinear_matrix(out_size, in_size, pad_to).T,
                            dtype=jnp.bfloat16)
            self._wwt_cache[key] = w
        return w

    def _get_bias_rows(self, c: int, w_out: int, w_pad: int):
        """(-mean/std) per channel, zeroed for columns >= w_out; (C,1,W_pad)."""
        key = (c, w_out, w_pad)
        b = self._bias_cache.get(key)
        if b is None:
            rows = np.zeros((c, 1, w_pad), dtype=np.float32)
            rows[:, 0, :w_out] = self._neg_mean_over_std[:c, None]
            b = jnp.asarray(rows)
            self._bias_cache[key] = b
        return b

    # ------------------------------ forward ---------------------------------
    def __call__(self, images: List[jnp.ndarray],
                 targets: Optional[List[Dict[str, jnp.ndarray]]] = None):
        size = float(self.min_size[-1])
        orig_sizes = [(int(img.shape[-2]), int(img.shape[-1])) for img in images]
        new_sizes = [_resized_hw(h, w, size, float(self.max_size),
                                 self.fixed_size) for (h, w) in orig_sizes]

        stride = float(self.size_divisible)
        n = len(images)
        max_c = max(int(img.shape[0]) for img in images)
        max_h = int(math.ceil(max(h for h, _ in new_sizes) / stride) * stride)
        max_w = int(math.ceil(max(w for _, w in new_sizes) / stride) * stride)

        h_in_max = max(h for h, _ in orig_sizes)
        w_in_max = max(w for _, w in orig_sizes)
        tm = _pick_row_tile(max_h, h_in_max, w_in_max, max_w)

        batch_shape = (n, max_c, max_h, max_w)
        same_c = all(int(img.shape[0]) == max_c for img in images)
        # When every image fills all max_c channels, each kernel writes its
        # whole slot -> skip the (redundant) full-canvas zero fill and let the
        # first image's pallas_call create the canvas.  Otherwise keep the
        # zeros init so missing-channel planes stay zero.
        batch = None if same_c else jnp.zeros(batch_shape, dtype=jnp.float32)

        out_targets = None if targets is None else [dict(t) for t in targets]
        for i, img in enumerate(images):
            assert img.ndim == 3, "images must be 3D [C, H, W]"
            c = int(img.shape[0])
            h_in, w_in = orig_sizes[i]
            h_out, w_out = new_sizes[i]

            wh = self._get_wh(h_out, h_in, max_h)
            wwt = self._get_wwt(w_out, w_in, max_w)
            bias_rows = self._get_bias_rows(c, w_out, max_w)
            meta = jnp.array([i, h_out], dtype=jnp.int32)
            image_bf16 = img.astype(jnp.bfloat16)   # one-time cast (not per tile)

            if batch is None:
                batch = _fresh_call(meta, self._scale, bias_rows, image_bf16,
                                    wh, wwt, tm=tm, batch_shape=batch_shape)
            else:
                batch = _update_call(batch, meta, self._scale, bias_rows,
                                     image_bf16, wh, wwt, tm=tm)

            if out_targets is not None and out_targets[i] is not None:
                t = out_targets[i]
                if 'boxes' in t:
                    t['boxes'] = _resize_boxes(t['boxes'], (h_in, w_in),
                                               (h_out, w_out))
                if 'keypoints' in t:
                    t['keypoints'] = _resize_keypoints(t['keypoints'],
                                                       (h_in, w_in),
                                                       (h_out, w_out))
                # TODO(synk): target['masks'] nearest-neighbour resize omitted.
        return ImageList(batch, new_sizes), out_targets


if __name__ == "__main__":
    key = jax.random.PRNGKey(0)
    k1, k2, k3 = jax.random.split(key, 3)

    # Two small images (list of CHW tensors in [0, 1]), different sizes.
    img0 = jax.random.uniform(k1, (3, 17, 23), dtype=jnp.float32)
    img1 = jax.random.uniform(k2, (3, 19, 21), dtype=jnp.float32)
    boxes0 = jnp.array([[1.0, 2.0, 10.0, 12.0], [3.0, 4.0, 20.0, 15.0]],
                       dtype=jnp.float32)
    boxes1 = jax.random.uniform(k3, (2, 4), dtype=jnp.float32) * 16.0
    targets = [{'boxes': boxes0}, {'boxes': boxes1}]

    transform = CustomRCNNTransformPallas(
        min_size=24, max_size=32,
        image_mean=[0.485, 0.456, 0.406],
        image_std=[0.229, 0.224, 0.225],
        size_divisible=8,
    )

    image_list, out_targets = transform([img0, img1], targets)
    jax.block_until_ready(image_list.tensors)
    jax.block_until_ready(out_targets[0]['boxes'])

    t = image_list.tensors
    assert t.ndim == 4 and t.shape[0] == 2
    assert t.shape[2] % 8 == 0 and t.shape[3] % 8 == 0
    assert bool(jnp.all(jnp.isfinite(t)))
    # Padding beyond each image's resized size must be exactly zero.
    for i, (h, w) in enumerate(image_list.image_sizes):
        assert bool(jnp.all(t[i, :, h:, :] == 0.0))
        assert bool(jnp.all(t[i, :, :, w:] == 0.0))
    print("KERNEL_OK")
</pallas_src>

<mosaic_0001>
module attributes {stable_mosaic.version = 11 : i64} {
  func.func @_kernel_fresh(%arg0: i32, %arg1: i32, %arg2: memref<2xi32, #tpu.memory_space<smem>>, %arg3: memref<3xf32, #tpu.memory_space<smem>>, %arg4: memref<1x1x32xf32, #tpu.memory_space<vmem>>, %arg5: memref<1x17x23xbf16, #tpu.memory_space<vmem>>, %arg6: memref<24x17xbf16, #tpu.memory_space<vmem>>, %arg7: memref<23x32xbf16, #tpu.memory_space<vmem>>, %arg8: memref<1x1x24x32xf32, #tpu.memory_space<vmem>>) attributes {dimension_semantics = [#tpu.dimension_semantics<parallel>, #tpu.dimension_semantics<parallel>], iteration_bounds = array<i64: 3, 1>, scalar_prefetch = 1 : i64, scratch_operands = 0 : i64, tpu.core_type = #tpu.core_type<tc>, window_params = [{transform_indices = @transform_0, window_bounds = array<i64: 3>}, {transform_indices = @transform_1, window_bounds = array<i64: 1, 1, 32>}, {transform_indices = @transform_2, window_bounds = array<i64: 1, 17, 23>}, {transform_indices = @transform_3, window_bounds = array<i64: 24, 17>}, {pipeline_mode = #tpu.pipeline_mode<synchronous>, transform_indices = @transform_4, window_bounds = array<i64: 23, 32>}, {transform_indices = @transform_5, window_bounds = array<i64: 1, 1, 24, 32>}]} {
    %c1 = arith.constant 1 : index
    %0 = memref.load %arg2[%c1] : memref<2xi32, #tpu.memory_space<smem>>
    %1 = arith.index_cast %arg0 : i32 to index
    %2 = memref.load %arg3[%1] : memref<3xf32, #tpu.memory_space<smem>>
    %c0 = arith.constant 0 : index
    %c0_0 = arith.constant 0 : index
    %3 = vector.load %arg6[%c0, %c0_0] : memref<24x17xbf16, #tpu.memory_space<vmem>>, vector<24x17xbf16>
    %c0_1 = arith.constant 0 : index
    %c0_2 = arith.constant 0 : index
    %c0_3 = arith.constant 0 : index
    %4 = vector.load %arg5[%c0_1, %c0_2, %c0_3] : memref<1x17x23xbf16, #tpu.memory_space<vmem>>, vector<1x17x23xbf16>
    %5 = vector.shape_cast %4 : vector<1x17x23xbf16> to vector<17x23xbf16>
    %cst = arith.constant dense<0.000000e+00> : vector<24x23xf32>
    %6 = tpu.matmul %3, %5, %cst {dimension_numbers = #tpu.dot_dimension_numbers<[1], [0], [0], [1], [0, 0, 1, 1], [], []>} : vector<24x17xbf16>, vector<17x23xbf16>, vector<24x23xf32> -> vector<24x23xf32>
    %7 = arith.truncf %6 : vector<24x23xf32> to vector<24x23xbf16>
    %c0_4 = arith.constant 0 : index
    %c0_5 = arith.constant 0 : index
    %8 = vector.load %arg7[%c0_4, %c0_5] : memref<23x32xbf16, #tpu.memory_space<vmem>>, vector<23x32xbf16>
    %cst_6 = arith.constant dense<0.000000e+00> : vector<24x32xf32>
    %9 = tpu.matmul %7, %8, %cst_6 {dimension_numbers = #tpu.dot_dimension_numbers<[1], [0], [0], [1], [0, 0, 1, 1], [], []>} : vector<24x23xbf16>, vector<23x32xbf16>, vector<24x32xf32> -> vector<24x32xf32>
    %10 = vector.broadcast %2 : f32 to vector<24x32xf32>
    %11 = arith.mulf %9, %10 : vector<24x32xf32>
    %c0_7 = arith.constant 0 : index
    %c0_8 = arith.constant 0 : index
    %c0_9 = arith.constant 0 : index
    %12 = vector.load %arg4[%c0_7, %c0_8, %c0_9] : memref<1x1x32xf32, #tpu.memory_space<vmem>>, vector<1x1x32xf32>
    %13 = vector.shape_cast %12 : vector<1x1x32xf32> to vector<1x32xf32>
    %c24_i32 = arith.constant 24 : i32
    %14 = arith.muli %arg1, %c24_i32 : i32
    %c24_i32_10 = arith.constant 24 : i32
    %15 = arith.addi %14, %c24_i32_10 : i32
    %16 = arith.cmpi sle, %15, %0 : i32
    %17 = arith.extui %16 : i1 to i32
    %c0_i32 = arith.constant 0 : i32
    %18 = arith.cmpi ne, %17, %c0_i32 : i32
    scf.if %18 {
      %23 = vector.broadcast %13 : vector<1x32xf32> to vector<24x32xf32>
      %24 = arith.addf %11, %23 : vector<24x32xf32>
      %c0_13 = arith.constant 0 : index
      %c0_14 = arith.constant 0 : index
      %c0_15 = arith.constant 0 : index
      %c0_16 = arith.constant 0 : index
      %25 = vector.load %arg8[%c0_13, %c0_14, %c0_15, %c0_16] : memref<1x1x24x32xf32, #tpu.memory_space<vmem>>, vector<1x1x24x32xf32>
      %26 = vector.shape_cast %25 : vector<1x1x24x32xf32> to vector<24x32xf32>
      %27 = vector.shape_cast %24 : vector<24x32xf32> to vector<1x1x24x32xf32>
      tpu.vector_store %arg8[%c0_13, %c0_14, %c0_15, %c0_16], %27 {strides = array<i32>} : memref<1x1x24x32xf32, #tpu.memory_space<vmem>>, vector<1x1x24x32xf32>,
    } else {
    }
    %c24_i32_11 = arith.constant 24 : i32
    %19 = arith.addi %14, %c24_i32_11 : i32
    %20 = arith.cmpi sgt, %19, %0 : i32
    %21 = arith.extui %20 : i1 to i32
    %c0_i32_12 = arith.constant 0 : i32
    %22 = arith.cmpi ne, %21, %c0_i32_12 : i32
    scf.if %22 {
      %23 = tpu.iota {dimensions = array<i32: 0>} : vector<24x32xi32>
      %24 = vector.broadcast %14 : i32 to vector<24x32xi32>
      %25 = arith.addi %23, %24 : vector<24x32xi32>
      %26 = vector.broadcast %0 : i32 to vector<24x32xi32>
      %27 = arith.cmpi slt, %25, %26 : vector<24x32xi32>
      %cst_13 = arith.constant 0.000000e+00 : f32
      %28 = vector.shape_cast %13 : vector<1x32xf32> to vector<1x32xf32>
      %29 = vector.broadcast %28 : vector<1x32xf32> to vector<24x32xf32>
      %30 = vector.broadcast %cst_13 : f32 to vector<24x32xf32>
      %31 = arith.select %27, %29, %30 : vector<24x32xi1>, vector<24x32xf32>
      %32 = arith.addf %11, %31 : vector<24x32xf32>
      %c0_14 = arith.constant 0 : index
      %c0_15 = arith.constant 0 : index
      %c0_16 = arith.constant 0 : index
      %c0_17 = arith.constant 0 : index
      %33 = vector.load %arg8[%c0_14, %c0_15, %c0_16, %c0_17] : memref<1x1x24x32xf32, #tpu.memory_space<vmem>>, vector<1x1x24x32xf32>
      %34 = vector.shape_cast %33 : vector<1x1x24x32xf32> to vector<24x32xf32>
      %35 = vector.shape_cast %32 : vector<24x32xf32> to vector<1x1x24x32xf32>
      tpu.vector_store %arg8[%c0_14, %c0_15, %c0_16, %c0_17], %35 {strides = array<i32>} : memref<1x1x24x32xf32, #tpu.memory_space<vmem>>, vector<1x1x24x32xf32>,
    } else {
    }
    return
  }
  func.func @transform_0(%arg0: i32, %arg1: i32, %arg2: memref<2xi32, #tpu.memory_space<smem>>) -> i32 {
    %c0_i32 = arith.constant 0 : i32
    %c0_i32_0 = arith.constant 0 : i32
    return %c0_i32 : i32
  }
  func.func @transform_1(%arg0: i32, %arg1: i32, %arg2: memref<2xi32, #tpu.memory_space<smem>>) -> (i32, i32, i32) {
    %c0_i32 = arith.constant 0 : i32
    %c0_i32_0 = arith.constant 0 : i32
    %c0_i32_1 = arith.constant 0 : i32
    return %arg0, %c0_i32, %c0_i32_0 : i32, i32, i32
  }
  func.func @transform_2(%arg0: i32, %arg1: i32, %arg2: memref<2xi32, #tpu.memory_space<smem>>) -> (i32, i32, i32) {
    %c0_i32 = arith.constant 0 : i32
    %c0_i32_0 = arith.constant 0 : i32
    %c0_i32_1 = arith.constant 0 : i32
    return %arg0, %c0_i32, %c0_i32_0 : i32, i32, i32
  }
  func.func @transform_3(%arg0: i32, %arg1: i32, %arg2: memref<2xi32, #tpu.memory_space<smem>>) -> (i32, i32) {
    %c0_i32 = arith.constant 0 : i32
    %c0_i32_0 = arith.constant 0 : i32
    return %arg1, %c0_i32 : i32, i32
  }
  func.func @transform_4(%arg0: i32, %arg1: i32, %arg2: memref<2xi32, #tpu.memory_space<smem>>) -> (i32, i32) {
    %c0_i32 = arith.constant 0 : i32
    %c0_i32_0 = arith.constant 0 : i32
    %c0_i32_1 = arith.constant 0 : i32
    return %c0_i32, %c0_i32_0 : i32, i32
  }
  func.func @transform_5(%arg0: i32, %arg1: i32, %arg2: memref<2xi32, #tpu.memory_space<smem>>) -> (i32, i32, i32, i32) {
    %c0 = arith.constant 0 : index
    %0 = memref.load %arg2[%c0] : memref<2xi32, #tpu.memory_space<smem>>
    %c0_i32 = arith.constant 0 : i32
    %c0_i32_0 = arith.constant 0 : i32
    return %0, %arg0, %arg1, %c0_i32 : i32, i32, i32, i32
  }
}

</mosaic_0001>

<llo_original>
// kernel: _fresh_call.1
$region0: #{_fresh_call.1}
  #allocation0 [shape = 'u32[]', space=smem, size = 0x4, offset = 0x4, fixed_abs, tag = 'smem constant byte address 0x4 - core index']
  #allocation1 [shape = 'u32[144,128]{1,0:T(1,128)}', space=vmem, size = 0x12000, scoped, tag = 'internal scratch']
  #allocation2 [shape = 's32[1]{0}', space=sflag, size = 0x4, scoped, tag = 'scoped memory for _fresh_call.1']
  #allocation3 [shape = 'u8[512]{0}', space=smem, size = 0x200, scoped, tag = 'prefetched SMEM operand 0']
  %s0 = inlined_call_operand.vmem [shape: s32[2], index: 0, kind: input, shape index: {}]
  %s1 = inlined_call_operand.vmem [shape: f32[3], index: 1, kind: input, shape index: {}]
  %s2 = inlined_call_operand.vmem [shape: f32[3,1,32], index: 2, kind: input, shape index: {}]
  %s3 = inlined_call_operand.vmem [shape: bf16[3,17,23], index: 3, kind: input, shape index: {}]
  %s4 = inlined_call_operand.vmem [shape: bf16[24,17], index: 4, kind: input, shape index: {}]
  %s5 = inlined_call_operand.vmem [shape: bf16[23,32], index: 5, kind: input, shape index: {}]
  %s6 = inlined_call_operand.hbm [shape: f32[2,3,24,32], index: 6, kind: output, shape index: {}]
  %s7 = sld [smem:[#allocation0]]
  $region65: #{_fresh_call.1} parent=0
    _
  %s9 = ssub.s32 1, %s7
  %s10 = scalar_select 0, %s9, %s7
  %s11 = sshll.u32 %s0, 4
  %s12 = int_to_ptr.vmem [resolvable:$true] %s11
  %14 = dma.vmem_to_smem %s12, 16, [#allocation3], [#allocation2]
  %15 = dma.done [#allocation2], 16
  %16 = sfence
  $region1: #{_fresh_call.1} parent=0
    #allocation4 [shape = 'u8[512]{0}', space=smem, size = 0x200, scoped, tag = 'input window, operand 1, single buffered']
    #allocation5 [shape = 's32[2]{0}', space=sflag, size = 0x8, scoped, tag = 'scoped memory for _fresh_call.1']
    #allocation6 [shape = 's32[2]{0}', space=sflag, size = 0x8, scoped, tag = 'scoped memory for _fresh_call.1']
    #allocation7 [shape = 'u8[24576]{0}', space=vmem, size = 0x6000, scoped, tag = 'output window, operand 0']
    %17 = vsyncpa [#allocation6], 0
    %18 = vsyncpa [#allocation5], 0
    %s19 = scalar_lea.sflag [#allocation5], 1
    %20 = vsyncpa %s19, 0
    loop: start=0, step=1, limit=5
    $region2: #{_fresh_call.1} parent=1 // loop_pre_header
      _
    $region3: #{_fresh_call.1} parent=1 // loop_header
      %s22 = sphi 0, %s26
      %p23 = scmp.ge.s32.totalorder %s22, 5
      %s29 = sphi 0, %s41
      %s30 = sphi 0, %s37
      %s31 = sphi 0, %s29
      %s32 = sphi 0, %s30
      %s33 = sphi 0, %s31
      %s34 = sphi 0, %s32
      %s42 = sphi 0, %s42
      %s44 = sphi 0, %s42
      %s45 = sphi 0, %s44
      %s59 = sphi 0, %s45
      %s65 = sphi 0, %s67
      %s68 = sphi 0, %s65
      %s69 = sphi 0, %s68
      %s85 = sphi 0, %s69
      %s91 = sphi 0, %s93
      %s94 = sphi 0, %s91
      %s95 = sphi 0, %s94
      %s111 = sphi 0, %s95
      %s117 = sphi 0, %s119
      %s120 = sphi 0, %s117
      %s121 = sphi 0, %s120
      %s137 = sphi 0, %s121
      %s141 = sphi 0, %s141
      %s143 = sphi 0, %s141
      %s144 = sphi 0, %s143
      %s158 = sphi 0, %s144
      %s170 = sphi 0, %s172
      %s173 = sphi 0, %s170
      %s174 = sphi 0, %s173
      %s190 = sphi 0, %s174
    $region4: #{_fresh_call.1} parent=1 // loop_header_branch
      %25 = sbr.rel (%p23) target = $region8
    $region5: #{_fresh_call.1} parent=1 // loop_body
      %s27 = ssub.s32 %s22, 1
      %s28 = ssub.s32 %s22, 2
      %s35 = sadd.s32 1, %s30
      %p36 = scmp.ge.s32.totalorder %s35, 1
      %s37 = scalar_select %p36, 0, %s35
      %s38 = sadd.s32 1, %s29
      %s39 = scalar_select %p36, %s38, %s29
      %p40 = scmp.ge.s32.totalorder %s39, 3
      %s41 = scalar_select %p40, 0, %s39
      %s43 = sadd.s32 %s42, 1
      %p46 = scmp.eq.s32.totalorder %s22, 2
      %p47 = scmp.ne.s32.totalorder %s42, %s44
      %p48 = scmp.eq.s32.totalorder %s22, 0
      %p49 = por %p47, %p48
      %p50 = scmp.ne.s32.totalorder %s42, %s44
      %p51 = scmp.eq.s32.totalorder %s27, 2
      %p52 = por %p50, %p51
      %p53 = scmp.ne.s32.totalorder %s44, %s45
      %p54 = scmp.eq.s32.totalorder %s27, 0
      %p55 = por %p53, %p54
      %p56 = scmp.ne.s32.totalorder %s44, %s45
      %p57 = scmp.eq.s32.totalorder %s28, 2
      %p58 = por %p56, %p57
      %p60 = scmp.ne.s32.totalorder %s45, %s59
      %p61 = scmp.eq.s32.totalorder %s28, 0
      %p62 = por %p60, %p61
      %s63 = ssub.s32 %s29, %s41
      %p64 = scmp.eq.s32.totalorder %s63, 0
      %s66 = sadd.s32 %s65, 1
      %s67 = scalar_select %p64, %s65, %s66
      %p70 = pneg %p64
      %p71 = scmp.eq.s32.totalorder %s22, 2
      %p72 = por %p70, %p71
      %p73 = scmp.ne.s32.totalorder %s65, %s68
      %p74 = scmp.eq.s32.totalorder %s22, 0
      %p75 = por %p73, %p74
      %p76 = scmp.ne.s32.totalorder %s65, %s68
      %p77 = scmp.eq.s32.totalorder %s27, 2
      %p78 = por %p76, %p77
      %p79 = scmp.ne.s32.totalorder %s68, %s69
      %p80 = scmp.eq.s32.totalorder %s27, 0
      %p81 = por %p79, %p80
      %p82 = scmp.ne.s32.totalorder %s68, %s69
      %p83 = scmp.eq.s32.totalorder %s28, 2
      %p84 = por %p82, %p83
      %p86 = scmp.ne.s32.totalorder %s69, %s85
      %p87 = scmp.eq.s32.totalorder %s28, 0
      %p88 = por %p86, %p87
      %s89 = ssub.s32 %s29, %s41
      %p90 = scmp.eq.s32.totalorder %s89, 0
      %s92 = sadd.s32 %s91, 1
      %s93 = scalar_select %p90, %s91, %s92
      %p96 = pneg %p90
      %p97 = scmp.eq.s32.totalorder %s22, 2
      %p98 = por %p96, %p97
      %p99 = scmp.ne.s32.totalorder %s91, %s94
      %p100 = scmp.eq.s32.totalorder %s22, 0
      %p101 = por %p99, %p100
      %p102 = scmp.ne.s32.totalorder %s91, %s94
      %p103 = scmp.eq.s32.totalorder %s27, 2
      %p104 = por %p102, %p103
      %p105 = scmp.ne.s32.totalorder %s94, %s95
      %p106 = scmp.eq.s32.totalorder %s27, 0
      %p107 = por %p105, %p106
      %p108 = scmp.ne.s32.totalorder %s94, %s95
      %p109 = scmp.eq.s32.totalorder %s28, 2
      %p110 = por %p108, %p109
      %p112 = scmp.ne.s32.totalorder %s95, %s111
      %p113 = scmp.eq.s32.totalorder %s28, 0
      %p114 = por %p112, %p113
      %s115 = ssub.s32 %s30, %s37
      %p116 = scmp.eq.s32.totalorder %s115, 0
      %s118 = sadd.s32 %s117, 1
      %s119 = scalar_select %p116, %s117, %s118
      %p122 = pneg %p116
      %p123 = scmp.eq.s32.totalorder %s22, 2
      %p124 = por %p122, %p123
      %p125 = scmp.ne.s32.totalorder %s117, %s120
      %p126 = scmp.eq.s32.totalorder %s22, 0
      %p127 = por %p125, %p126
      %p128 = scmp.ne.s32.totalorder %s117, %s120
      %p129 = scmp.eq.s32.totalorder %s27, 2
      %p130 = por %p128, %p129
      %p131 = scmp.ne.s32.totalorder %s120, %s121
      %p132 = scmp.eq.s32.totalorder %s27, 0
      %p133 = por %p131, %p132
      %p134 = scmp.ne.s32.totalorder %s120, %s121
      %p135 = scmp.eq.s32.totalorder %s28, 2
      %p136 = por %p134, %p135
      %p138 = scmp.ne.s32.totalorder %s121, %s137
      %p139 = scmp.eq.s32.totalorder %s28, 0
      %p140 = por %p138, %p139
      %s142 = sadd.s32 %s141, 1
      %p145 = scmp.eq.s32.totalorder %s22, 2
      %p146 = scmp.ne.s32.totalorder %s141, %s143
      %p147 = scmp.eq.s32.totalorder %s22, 0
      %p148 = por %p146, %p147
      %p149 = scmp.ne.s32.totalorder %s141, %s143
      %p150 = scmp.eq.s32.totalorder %s27, 2
      %p151 = por %p149, %p150
      %p152 = scmp.ne.s32.totalorder %s143, %s144
      %p153 = scmp.eq.s32.totalorder %s27, 0
      %p154 = por %p152, %p153
      %p155 = scmp.ne.s32.totalorder %s143, %s144
      %p156 = scmp.eq.s32.totalorder %s28, 2
      %p157 = por %p155, %p156
      %p159 = scmp.ne.s32.totalorder %s144, %s158
      %p160 = scmp.eq.s32.totalorder %s28, 0
      %p161 = por %p159, %p160
      %s162 = sld [smem:[#allocation3]]
      %s163 = sld [smem:[#allocation3]]
      %s164 = ssub.s32 %s162, %s163
      %s165 = ssub.s32 %s29, %s41
      %s166 = sor.u32 %s164, %s165
      %s167 = ssub.s32 %s30, %s37
      %s168 = sor.u32 %s166, %s167
      %p169 = scmp.eq.s32.totalorder %s168, 0
      %s171 = sadd.s32 %s170, 1
      %s172 = scalar_select %p169, %s170, %s171
      %p175 = pneg %p169
      %p176 = scmp.eq.s32.totalorder %s22, 2
      %p177 = por %p175, %p176
      %p178 = scmp.ne.s32.totalorder %s170, %s173
      %p179 = scmp.eq.s32.totalorder %s22, 0
      %p180 = por %p178, %p179
      %p181 = scmp.ne.s32.totalorder %s170, %s173
      %p182 = scmp.eq.s32.totalorder %s27, 2
      %p183 = por %p181, %p182
      %p184 = scmp.ne.s32.totalorder %s173, %s174
      %p185 = scmp.eq.s32.totalorder %s27, 0
      %p186 = por %p184, %p185
      %p187 = scmp.ne.s32.totalorder %s173, %s174
      %p188 = scmp.eq.s32.totalorder %s28, 2
      %p189 = por %p187, %p188
      %p191 = scmp.ne.s32.totalorder %s174, %s190
      %p192 = scmp.eq.s32.totalorder %s28, 0
      %p193 = por %p191, %p192
      %p194 = scmp.le.s32.totalorder 1, %s22
      %p195 = scmp.lt.s32.totalorder %s22, 4
      %p196 = pnand %p194, %p195
      %p197 = pneg %p196
      // Predicated region
      $region9: #{_fresh_call.1} parent=5 // pred_check
        _
      $region10: #{_fresh_call.1} parent=5 // pred_check_branch
        %199 = sbr.rel (%p196) target = $region12
      $region11: #{_fresh_call.1} parent=5 // pred_region
        %s200 = ssub.s32 %s22, 1
        // Predicated region
        $region13: #{_fresh_call.1} parent=11 // pred_check
          %p201 = pneg %p55
        $region14: #{_fresh_call.1} parent=11 // pred_check_branch
          %203 = sbr.rel (%p201) target = $region16
        $region15: #{_fresh_call.1} parent=11 // pred_region
          %s205 = ssub.s32 16, 16
          %206 = vsyncadd [#allocation6], %s205
          %s208 = sshll.u32 %s1, 4
          %s209 = int_to_ptr.vmem [resolvable:$true] %s208
          %211 = dma.vmem_to_smem %s209, 16, [#allocation4], [#allocation6]
        $region16: #{_fresh_call.1} parent=11 // pred_fallthru
          _
        // Predicated region
        $region17: #{_fresh_call.1} parent=11 // pred_check
          %p212 = pneg %p133
        $region18: #{_fresh_call.1} parent=11 // pred_check_branch
          %214 = sbr.rel (%p212) target = $region20
        $region19: #{_fresh_call.1} parent=11 // pred_region
          %s215 = smul.u32 3, %s32
          %p216 = scmp.lt.s32.totalorder %s215, 2
          %s217 = scalar_select %p216, %s215, 2
          %s218 = smul.addr %s217, 4
          %s219 = scalar_lea.vmem %s4, %s218
          %s220 = smul.u32 3, %s32
        $region20: #{_fresh_call.1} parent=11 // pred_fallthru
          _
        // Predicated region
        $region21: #{_fresh_call.1} parent=11 // pred_check
          %p221 = pneg %p154
        $region22: #{_fresh_call.1} parent=11 // pred_check_branch
          %223 = sbr.rel (%p221) target = $region24
        $region23: #{_fresh_call.1} parent=11 // pred_region
          _
        $region24: #{_fresh_call.1} parent=11 // pred_fallthru
          _
      $region12: #{_fresh_call.1} parent=5 // pred_fallthru
        _
      %p224 = scmp.lt.s32.totalorder %s22, 3
      // Predicated region
      $region25: #{_fresh_call.1} parent=5 // pred_check
        %p225 = pneg %p224
      $region26: #{_fresh_call.1} parent=5 // pred_check_branch
        %227 = sbr.rel (%p225) target = $region28
      $region27: #{_fresh_call.1} parent=5 // pred_region
        // Predicated region
        $region29: #{_fresh_call.1} parent=27 // pred_check
          %p228 = pneg %p75
        $region30: #{_fresh_call.1} parent=27 // pred_check_branch
          %230 = sbr.rel (%p228) target = $region32
        $region31: #{_fresh_call.1} parent=27 // pred_region
          %p231 = scmp.lt.s32.totalorder %s29, 2
          %s232 = scalar_select %p231, %s29, 2
          %s233 = scalar_lea.vmem %s2, %s232
        $region32: #{_fresh_call.1} parent=27 // pred_fallthru
          _
        // Predicated region
        $region33: #{_fresh_call.1} parent=27 // pred_check
          %p234 = pneg %p101
        $region34: #{_fresh_call.1} parent=27 // pred_check_branch
          %236 = sbr.rel (%p234) target = $region36
        $region35: #{_fresh_call.1} parent=27 // pred_region
          %p237 = scmp.lt.s32.totalorder %s29, 2
          %s238 = scalar_select %p237, %s29, 2
          %s239 = smul.addr %s238, 3
          %s240 = smul.addr %s239, 4
          %s241 = scalar_lea.vmem %s3, %s240
        $region36: #{_fresh_call.1} parent=27 // pred_fallthru
          _
      $region28: #{_fresh_call.1} parent=5 // pred_fallthru
        _
      %p242 = scmp.le.s32.totalorder 1, %s22
      %p243 = scmp.lt.s32.totalorder %s22, 4
      %p244 = pnand %p242, %p243
      %p245 = pneg %p244
      // Predicated region
      $region37: #{_fresh_call.1} parent=5 // pred_check
        _
      $region38: #{_fresh_call.1} parent=5 // pred_check_branch
        %247 = sbr.rel (%p244) target = $region40
      $region39: #{_fresh_call.1} parent=5 // pred_region
        %s248 = ssub.s32 %s22, 1
        // Predicated region
        $region41: #{_fresh_call.1} parent=39 // pred_check
          %p249 = pneg %p55
        $region42: #{_fresh_call.1} parent=39 // pred_check_branch
          %251 = sbr.rel (%p249) target = $region44
        $region43: #{_fresh_call.1} parent=39 // pred_region
          %252 = dma.done [#allocation6], 16
        $region44: #{_fresh_call.1} parent=39 // pred_fallthru
          _
        %253 = sfence
        %p254 = pneg %p55
        %p255 = pneg %p52
        %p256 = scmp.lt.s32.totalorder %s31, 2
        %s257 = scalar_select %p256, %s31, 2
        %s258 = scalar_lea.vmem %s2, %s257
        %p259 = pneg %p81
        %p260 = pneg %p78
        %p261 = scmp.lt.s32.totalorder %s31, 2
        %s262 = scalar_select %p261, %s31, 2
        %s263 = smul.addr %s262, 3
        %s264 = smul.addr %s263, 4
        %s265 = scalar_lea.vmem %s3, %s264
        %p266 = pneg %p107
        %p267 = pneg %p104
        %s268 = smul.u32 3, %s32
        %p269 = scmp.lt.s32.totalorder %s268, 2
        %s270 = scalar_select %p269, %s268, 2
        %s271 = smul.addr %s270, 4
        %s272 = scalar_lea.vmem %s4, %s271
        %p273 = pneg %p133
        %p274 = pneg %p130
        %p275 = pneg %p154
        %p276 = pneg %p151
        %p277 = pneg %p186
        %p278 = pneg %p183
        %s279 = sand.u32 %s173, 1
        %s280 = scalar_lea.sflag [#allocation5], %s279
        %s281 = sand.u32 %s173, 1
        %s282 = smul.addr %s281, 24
        %s283 = scalar_lea.vmem [#allocation7], %s282
        %p284 = scmp.lt.s32.totalorder %s31, 2
        %s285 = scalar_select %p284, %s31, 2
        %s286 = scalar_lea.vmem %s2, %s285
        %p287 = scmp.lt.s32.totalorder %s31, 2
        %s288 = scalar_select %p287, %s31, 2
        %s289 = smul.addr %s288, 3
        %s290 = smul.addr %s289, 4
        %s291 = scalar_lea.vmem %s3, %s290
        %s292 = smul.u32 3, %s32
        %p293 = scmp.lt.s32.totalorder %s292, 2
        %s294 = scalar_select %p293, %s292, 2
        %s295 = smul.addr %s294, 4
        %s296 = scalar_lea.vmem %s4, %s295
        %s297 = smul.u32 3, %s32
        %s298 = sld [smem:[#allocation3]]
        %s299 = smul.u32 3, %s32
        %s301 = sld [smem:[#allocation3 + $0x1]]
        %s302 = sld [smem:[#allocation4 + %s31]]
        %v303 = vld [vmem:[%s296] sm:$0xf]
        %v304 = vld [vmem:[%s296 + $0x4] sm:$0xf]
        %v305 = vld [vmem:[%s296 + $0x8] sm:$0xf]
        %v306 = vld [vmem:[%s291] sm:$0xf]
        %v307 = vld [vmem:[%s291 + $0x4] sm:$0xf]
        %v308 = vld [vmem:[%s291 + $0x8] sm:$0x1]
        %v312 = vunpack.c.l.b16 %v303
        %v313 = vunpack.c.l.b16 %v304
        %v314 = vunpack.c.l.b16 %v305
        %v315 = vpack.c.b16 %v313, %v312
        %v316 = vpack.c.b16 %v314, %v314
        %v320 = vunpack.c.l.b16 %v306
        %v321 = vunpack.c.l.b16 %v307
        %v322 = vunpack.c.l.b16 %v308
        %v323 = vpack.c.b16 %v321, %v320
        %v324 = vpack.c.b16 %v322, %v322
        %vm326 = vcmask 138240
        %v328 = vsel %vm326, %v315, 0
        %v331 = vsel %vm326, %v316, 0
        %vm333 = vcmask 1040384
        %v334 = vsel 0, 4294967295, 65535
        %v335 = vsel %vm333, %v334, 0
        %v337 = vand.u32 %v324, %v335
        %339 = vmatprep.subr.bf16.mxu0 0
        %340 = vmatpush1.bf16.msra.mxu0 0
        %341 = vmatprep.subr.bf16.mxu0 0
        %342 = vmatpush1.bf16.msra.mxu0 0
        %343 = vmatprep.subr.bf16.mxu0 0
        %344 = vmatpush1.bf16.msra.mxu0 0
        %345 = vmatprep.subr.bf16.mxu0 0
        %346 = vmatpush1.bf16.msra.mxu0 0
        %347 = vmatprep.subr.bf16.mxu0 0
        %348 = vmatpush1.bf16.msra.mxu0 0
        %349 = vmatprep.subr.bf16.mxu0 0
        %350 = vmatpush1.bf16.msra.mxu0 0
        %351 = vmatprep.subr.bf16.mxu0 0
        %352 = vmatpush1.bf16.msra.mxu0 %v337
        %353 = vmatprep.subr.bf16.mxu0 0
        %354 = vmatpush1.bf16.msra.mxu0 %v323
        %355 = vmatprep.subr.bf16.mxu0 0
        %356 = vmatpush2.bf16.msra.mxu0 0
        %357 = vmatprep.subr.bf16.mxu0 0
        %358 = vmatpush2.bf16.msra.mxu0 0
        %359 = vmatprep.subr.bf16.mxu0 0
        %360 = vmatpush2.bf16.msra.mxu0 0
        %361 = vmatprep.subr.bf16.mxu0 0
        %362 = vmatpush2.bf16.msra.mxu0 0
        %363 = vmatprep.subr.bf16.mxu0 0
        %364 = vmatpush2.bf16.msra.mxu0 0
        %365 = vmatprep.subr.bf16.mxu0 0
        %366 = vmatpush2.bf16.msra.mxu0 0
        %367 = vmatprep.subr.bf16.mxu0 0
        %368 = vmatpush2.bf16.msra.mxu0 0
        %369 = vmatprep.subr.bf16.mxu0 0
        %370 = vmatpush2.bf16.msra.mxu0 0
        %371 = vmatprep.mubr.bf16.mxu0 0
        %372 = vmatmul.mubr.bf16.gmra.mxu0 %v328
        %v373 = vpop.f32.mrf.mxu0
        %v374 = vadd.f32 0.0, %v373
        %v375 = vpop.f32.mrf.mxu0
        %v376 = vpop.f32.mrf.mxu0
        %v377 = vadd.f32 0.0, %v376
        %v378 = vpop.f32.mrf.mxu0
        %379 = vmatprep.mubr.bf16.mxu0 0
        %380 = vmatmul.mubr.bf16.gmra.mxu0 %v331
        %v381 = vpop.f32.mrf.mxu0
        %v382 = vadd.f32 0.0, %v381
        %v383 = vpop.f32.mrf.mxu0
        %v384 = vpop.f32.mrf.mxu0
        %v385 = vpop.f32.mrf.mxu0
        %386 = vdwg.mxu0
        %v387 = vpack.c.bf16 %v377, %v374
        %v388 = vpack.c.bf16 %v382, %v382
        %v389 = vld [vmem:[%s5] sm:$0xf]
        %v390 = vld [vmem:[%s5 + $0x4] sm:$0xf]
        %v391 = vld [vmem:[%s5 + $0x8] sm:$0xf]
        %v395 = vunpack.c.l.b16 %v389
        %v396 = vunpack.c.l.b16 %v390
        %v397 = vunpack.c.l.b16 %v391
        %v398 = vpack.c.b16 %v396, %v395
        %v399 = vpack.c.b16 %v397, %v397
        %vm401 = vcmask 187392
        %v403 = vsel %vm401, %v387, 0
        %v406 = vsel %vm401, %v388, 0
        %vm408 = vcmask 1042432
        %vm409 = vcmask 1043456
        %v410 = vsel %vm408, 4294967295, 65535
        %v411 = vsel %vm409, %v410, 0
        %v413 = vand.u32 %v399, %v411
        %415 = vmatprep.subr.bf16.mxu0 0
        %416 = vmatpush1.bf16.msra.mxu0 0
        %417 = vmatprep.subr.bf16.mxu0 0
        %418 = vmatpush1.bf16.msra.mxu0 0
        %419 = vmatprep.subr.bf16.mxu0 0
        %420 = vmatpush1.bf16.msra.mxu0 0
        %421 = vmatprep.subr.bf16.mxu0 0
        %422 = vmatpush1.bf16.msra.mxu0 0
        %423 = vmatprep.subr.bf16.mxu0 0
        %424 = vmatpush1.bf16.msra.mxu0 0
        %425 = vmatprep.subr.bf16.mxu0 0
        %426 = vmatpush1.bf16.msra.mxu0 0
        %427 = vmatprep.subr.bf16.mxu0 0
        %428 = vmatpush1.bf16.msra.mxu0 %v413
        %429 = vmatprep.subr.bf16.mxu0 0
        %430 = vmatpush1.bf16.msra.mxu0 %v398
        %431 = vmatprep.subr.bf16.mxu0 0
        %432 = vmatpush2.bf16.msra.mxu0 0
        %433 = vmatprep.subr.bf16.mxu0 0
        %434 = vmatpush2.bf16.msra.mxu0 0
        %435 = vmatprep.subr.bf16.mxu0 0
        %436 = vmatpush2.bf16.msra.mxu0 0
        %437 = vmatprep.subr.bf16.mxu0 0
        %438 = vmatpush2.bf16.msra.mxu0 0
        %439 = vmatprep.subr.bf16.mxu0 0
        %440 = vmatpush2.bf16.msra.mxu0 0
        %441 = vmatprep.subr.bf16.mxu0 0
        %442 = vmatpush2.bf16.msra.mxu0 0
        %443 = vmatprep.subr.bf16.mxu0 0
        %444 = vmatpush2.bf16.msra.mxu0 0
        %445 = vmatprep.subr.bf16.mxu0 0
        %446 = vmatpush2.bf16.msra.mxu0 0
        %447 = vmatprep.mubr.bf16.mxu0 0
        %448 = vmatmul.mubr.bf16.gmra.mxu0 %v403
        %v449 = vpop.f32.mrf.mxu0
        %v450 = vadd.f32 0.0, %v449
        %v451 = vpop.f32.mrf.mxu0
        %v452 = vpop.f32.mrf.mxu0
        %v453 = vadd.f32 0.0, %v452
        %v454 = vpop.f32.mrf.mxu0
        %455 = vmatprep.mubr.bf16.mxu0 0
        %456 = vmatmul.mubr.bf16.gmra.mxu0 %v406
        %v457 = vpop.f32.mrf.mxu0
        %v458 = vadd.f32 0.0, %v457
        %v459 = vpop.f32.mrf.mxu0
        %v460 = vpop.f32.mrf.mxu0
        %v461 = vpop.f32.mrf.mxu0
        %462 = vdwg.mxu0
        %v463 = vstv %s302
        %v464 = vmul.f32 %v450, %v463
        %v465 = vmul.f32 %v453, %v463
        %v466 = vmul.f32 %v458, %v463
        %v467 = vld [vmem:[%s286] sm:$0x1]
        %s468 = smul.u32 %s32, 24
        %s469 = sadd.s32 %s468, 24
        %p470 = scmp.le.s32.totalorder %s469, %s301
        // Predicated region
        $region45: #{_fresh_call.1} parent=39 // pred_check
          %p471 = pneg %p470
        $region46: #{_fresh_call.1} parent=39 // pred_check_branch
          %473 = sbr.rel (%p471) target = $region48
        $region47: #{_fresh_call.1} parent=39 // pred_region
          %v475 = vlaneseq
          %v476 = vshrl.u32 %v475, 7
          %v477 = vsub.s32 0, %v476
          %v478 = vrot.slane %v467, %v477
          %v480 = vadd.f32 %v464, %v478
          %v481 = vadd.f32 %v465, %v478
          %v482 = vadd.f32 %v466, %v478
          %vm483 = vcmask 261120
          %484 = vst.msk [vmem:[%s283] sm:$0xff] %vm483, %v480
          %485 = vst.msk [vmem:[%s283 + $0x8] sm:$0xff] %vm483, %v481
          %486 = vst.msk [vmem:[%s283 + $0x10] sm:$0xff] %vm483, %v482
        $region48: #{_fresh_call.1} parent=39 // pred_fallthru
          _
        %p487 = scmp.gt.s32.totalorder %s469, %s301
        // Predicated region
        $region49: #{_fresh_call.1} parent=39 // pred_check
          %p488 = pneg %p487
        $region50: #{_fresh_call.1} parent=39 // pred_check_branch
          %490 = sbr.rel (%p488) target = $region52
        $region51: #{_fresh_call.1} parent=39 // pred_region
          %v491 = vlaneseq
          %v492 = vshrl.u32 %v491, 7
          %v493 = vadd.s32 %v492, 8
          %v494 = vadd.s32 %v492, 16
          %v495 = vstv %s468
          %v496 = vadd.s32 %v492, %v495
          %v497 = vadd.s32 %v493, %v495
          %v498 = vadd.s32 %v494, %v495
          %v499 = vstv %s301
          %vm500 = vcmp.lt.s32.totalorder %v496, %v499
          %vm501 = vcmp.lt.s32.totalorder %v497, %v499
          %vm502 = vcmp.lt.s32.totalorder %v498, %v499
          %v504 = vlaneseq
          %v505 = vshrl.u32 %v504, 7
          %v506 = vsub.s32 0, %v505
          %v507 = vrot.slane %v467, %v506
          %v509 = vsel %vm500, %v507, 0.0
          %v510 = vsel %vm501, %v507, 0.0
          %v511 = vsel %vm502, %v507, 0.0
          %v512 = vadd.f32 %v464, %v509
          %v513 = vadd.f32 %v465, %v510
          %v514 = vadd.f32 %v466, %v511
          %vm515 = vcmask 261120
          %516 = vst.msk [vmem:[%s283] sm:$0xff] %vm515, %v512
          %517 = vst.msk [vmem:[%s283 + $0x8] sm:$0xff] %vm515, %v513
          %518 = vst.msk [vmem:[%s283 + $0x10] sm:$0xff] %vm515, %v514
        $region52: #{_fresh_call.1} parent=39 // pred_fallthru
          _
        %s519 = sand.u32 %s173, 1
        %s520 = scalar_lea.sflag [#allocation5], %s519
        %s521 = sand.u32 %s173, 1
        %s522 = smul.addr %s521, 24
        %s523 = scalar_lea.vmem [#allocation7], %s522
        // Predicated region
        $region53: #{_fresh_call.1} parent=39 // pred_check
          %p524 = pneg %p183
        $region54: #{_fresh_call.1} parent=39 // pred_check_branch
          %526 = sbr.rel (%p524) target = $region56
        $region55: #{_fresh_call.1} parent=39 // pred_region
          %s527 = sld [smem:[#allocation3]]
          %s528 = smul.u32 3, %s32
          %s530 = ssub.s32 384, 384
          %531 = vsyncadd %s520, %s530
          %s532 = smul.addr %s31, 3
          %s533 = sadd.s32 %s528, %s532
          %s534 = smul.addr %s527, 9
          %s535 = sadd.s32 %s533, %s534
          %s536 = smul.addr %s535, 128
          %s537 = scalar_lea.hbm %s6, %s536
          %s538 = sshll.u32 %s523, 4
          %s539 = int_to_ptr.vmem [resolvable:$true] %s538
          %544 = dma.vmem_to_hbm [thread:$0]  %s539, 384, %s537, %s520, 128, 128, 8
        $region56: #{_fresh_call.1} parent=39 // pred_fallthru
          _
      $region40: #{_fresh_call.1} parent=5 // pred_fallthru
        _
      %p545 = scmp.le.s32.totalorder 2, %s22
      // Predicated region
      $region57: #{_fresh_call.1} parent=5 // pred_check
        %p546 = pneg %p545
      $region58: #{_fresh_call.1} parent=5 // pred_check_branch
        %548 = sbr.rel (%p546) target = $region60
      $region59: #{_fresh_call.1} parent=5 // pred_region
        %s549 = ssub.s32 %s22, 2
        // Predicated region
        $region61: #{_fresh_call.1} parent=59 // pred_check
          %p550 = pneg %p189
        $region62: #{_fresh_call.1} parent=59 // pred_check_branch
          %552 = sbr.rel (%p550) target = $region64
        $region63: #{_fresh_call.1} parent=59 // pred_region
          %s553 = sand.u32 %s174, 1
          %s554 = scalar_lea.sflag [#allocation5], %s553
          %s555 = sand.u32 %s174, 1
          %s556 = smul.addr %s555, 24
          %s557 = scalar_lea.vmem [#allocation7], %s556
          %558 = dma.done %s554, 384
        $region64: #{_fresh_call.1} parent=59 // pred_fallthru
          _
      $region60: #{_fresh_call.1} parent=5 // pred_fallthru
        _
    $region6: #{_fresh_call.1} parent=1 // loop_footer
      %s26 = sadd.s32 1, %s22
    $region7: #{_fresh_call.1} parent=1 // loop_footer_branch
      %21 = sbr.rel target = $region3
    $region8: #{_fresh_call.1} parent=1 // loop_exit
      _
    %559 = vsyncpa [#allocation5], 1
    %s560 = scalar_lea.sflag [#allocation5], 1
    %561 = vsyncpa %s560, 1
    %562 = vsyncpa [#allocation6], 1
    %s563 = scalar_lea.sflag [#allocation6], 1
    %564 = vsyncpa %s563, 1

</llo_original>
